<compile_context>
chip_gen: v7x
topology: tpu7x:2x2x1
jax: 0.10.0
libtpu: 0.0.40
codegen_flags: <defaults>
</compile_context>

<pallas_src>
import functools

import jax
import jax.numpy as jnp
from jax.experimental import pallas as pl
from jax.experimental.pallas import tpu as pltpu

CHUNK = 512  # batch lanes processed per inner step (multiple of 128)


def _round_up(n, m):
    return ((n + m - 1) // m) * m


def _mlp_kernel(x_ref, w1_ref, b1_ref, w2_ref, b2_ref, w3_ref, b3_ref, o_ref):
    # x_ref: (tb, 10) batch-major tile.  o_ref: (tb // CHUNK, 1, CHUNK) -- batch on lanes.
    w1 = w1_ref[...]; b1 = b1_ref[...]
    w2 = w2_ref[...]; b2 = b2_ref[...]
    w3 = w3_ref[...]; b3 = b3_ref[...]
    nchunks = o_ref.shape[0]  # static: tb // CHUNK

    def body(c, carry):
        start = pl.multiple_of(c * CHUNK, CHUNK)
        xc = x_ref[pl.ds(start, CHUNK), :]                      # (CHUNK, 10), batch-major
        # fc1 + relu: contract x's feature dim (1) against w1's in-dim (1)
        # -> feature-major (55, CHUNK); the small flip runs on the XLU.
        h1 = jax.lax.dot_general(w1, xc, (((1,), (1,)), ((), ())),
                                 preferred_element_type=jnp.float32) + b1
        h1 = jnp.maximum(h1, 0.0)
        # fc2 + relu: (20, 55) @ (55, CHUNK) -> (20, CHUNK)
        h2 = jnp.dot(w2, h1, preferred_element_type=jnp.float32) + b2
        h2 = jnp.maximum(h2, 0.0)
        # fc3: (1, 20) @ (20, CHUNK) -> (1, CHUNK)
        z = jnp.dot(w3, h2, preferred_element_type=jnp.float32) + b3
        # Numerically stable sigmoid with a single reciprocal (EUP) instead of two divides.
        e = jnp.exp(-jnp.abs(z))
        r = pl.reciprocal(1.0 + e, approx=False)
        o_ref[c] = jnp.where(z >= 0.0, r, e * r)                # lane-dense (1, CHUNK) store
        return carry

    jax.lax.fori_loop(0, nchunks, body, 0, unroll=min(nchunks, 8))


def net_forward(x, params, *, tb_max=32768, use_bf16=False):
    """x: (B, 10) float32.  params hold PyTorch-layout weights:
       w1 (55,10), b1 (55,1), w2 (20,55), b2 (20,1), w3 (1,20), b3 (1,1)."""
    w1, b1 = params["w1"], params["b1"]
    w2, b2 = params["w2"], params["b2"]
    w3, b3 = params["w3"], params["b3"]

    B, D = x.shape
    assert D == 10

    # Only tiny batches get padded (<= CHUNK-1 rows); large batches are never
    # copied / transposed / padded in the wrapper.
    if B < CHUNK:
        x_in = jnp.pad(x, ((0, CHUNK - B), (0, 0)))
    else:
        x_in = x
    Bx = x_in.shape[0]

    # Batch tile: as large as possible (amortize per-grid-step overhead), but
    # (a) a multiple of CHUNK, (b) <= the batch, (c) small enough that the grid
    # keeps >= 2 steps when the batch allows it (v7x megacore has 2 TensorCores).
    half = _round_up(pl.cdiv(Bx, 2), CHUNK)
    tb = max(CHUNK, min(tb_max - tb_max % CHUNK, half, (Bx // CHUNK) * CHUNK))
    grid = (pl.cdiv(Bx, tb),)

    if use_bf16:
        # TODO(synk): bf16 inputs halve DMA bytes but loosen accuracy to ~bf16.
        x_in = x_in.astype(jnp.bfloat16)
        w1, w2, w3 = (w.astype(jnp.bfloat16) for w in (w1, w2, w3))

    n_groups = pl.cdiv(Bx, CHUNK)          # output stored as (group, 1, CHUNK)
    resident = lambda i: (0, 0)            # weights / biases stay VMEM-resident

    out = pl.pallas_call(
        _mlp_kernel,
        out_shape=jax.ShapeDtypeStruct((n_groups, 1, CHUNK), jnp.float32),
        grid=grid,
        in_specs=[
            pl.BlockSpec((tb, D), lambda i: (i, 0)),   # batch-major x tile (pipelined)
            pl.BlockSpec((55, 10), resident),          # w1
            pl.BlockSpec((55, 1), resident),           # b1
            pl.BlockSpec((20, 55), resident),          # w2
            pl.BlockSpec((20, 1), resident),           # b2
            pl.BlockSpec((1, 20), resident),           # w3
            pl.BlockSpec((1, 1), resident),            # b3
        ],
        out_specs=pl.BlockSpec((tb // CHUNK, 1, CHUNK), lambda i: (i, 0, 0)),
        compiler_params=pltpu.CompilerParams(
            dimension_semantics=("parallel",),
            vmem_limit_bytes=32 * 1024 * 1024),
    )(x_in, w1, b1, w2, b2, w3, b3)

    # (n_groups, 1, CHUNK) flattens to batch order; drop pad / OOB garbage columns.
    return out.reshape(-1)[:B].reshape(B, 1)


def init_params(key):
    """Deterministic init mirroring nn.Linear (10->55->20->1), PyTorch layout:
       W is (out, in), bias stored as a column (out, 1) for feature-major math."""
    k1, k2, k3, k4, k5, k6 = jax.random.split(key, 6)

    def uniform(k, shape, fan_in):
        bound = 1.0 / jnp.sqrt(float(fan_in))
        return jax.random.uniform(k, shape, jnp.float32, -bound, bound)

    return {
        "w1": uniform(k1, (55, 10), 10),
        "b1": uniform(k2, (55, 1), 10),
        "w2": uniform(k3, (20, 55), 55),
        "b2": uniform(k4, (20, 1), 55),
        "w3": uniform(k5, (1, 20), 20),
        "b3": uniform(k6, (1, 1), 20),
    }


def reference_forward(x, p):
    h1 = jnp.maximum(x @ p["w1"].T + p["b1"].T, 0.0)
    h2 = jnp.maximum(h1 @ p["w2"].T + p["b2"].T, 0.0)
    return jax.nn.sigmoid(h2 @ p["w3"].T + p["b3"].T)


if __name__ == "__main__":
    key = jax.random.PRNGKey(0)
    kx, kp, kx2 = jax.random.split(key, 3)
    params = init_params(kp)

    # Default-precision TPU matmuls round f32 operands to bf16 and the kernel's
    # feature-major accumulation order differs from the XLA reference, so use a
    # bf16-level tolerance.
    tol = dict(atol=2e-3, rtol=2e-3)

    # Small case (single grid step, padded tiny-batch path).
    batch = 8
    x = jax.random.normal(kx, (batch, 10), jnp.float32)
    out = jax.block_until_ready(net_forward(x, params))
    ref = reference_forward(x, params)
    assert out.shape == (batch, 1), out.shape
    assert jnp.allclose(out, ref, **tol), "mismatch vs reference (B=8)"

    # Non-divisible batch exercising the padding / partial-block path.
    batch2 = 300
    x2 = jax.random.normal(kx2, (batch2, 10), jnp.float32)
    out2 = jax.block_until_ready(net_forward(x2, params))
    ref2 = reference_forward(x2, params)
    assert out2.shape == (batch2, 1), out2.shape
    assert jnp.allclose(out2, ref2, **tol), "mismatch vs reference (B=300)"

    print("KERNEL_OK")
</pallas_src>

<mosaic_0001>
module attributes {stable_mosaic.version = 11 : i64} {
  func.func @_mlp_kernel(%arg0: i32, %arg1: memref<512x10xf32, #tpu.memory_space<vmem>>, %arg2: memref<55x10xf32, #tpu.memory_space<vmem>>, %arg3: memref<55x1xf32, #tpu.memory_space<vmem>>, %arg4: memref<20x55xf32, #tpu.memory_space<vmem>>, %arg5: memref<20x1xf32, #tpu.memory_space<vmem>>, %arg6: memref<1x20xf32, #tpu.memory_space<vmem>>, %arg7: memref<1x1xf32, #tpu.memory_space<vmem>>, %arg8: memref<1x1x512xf32, #tpu.memory_space<vmem>>) attributes {dimension_semantics = [#tpu.dimension_semantics<parallel>], iteration_bounds = array<i64: 1>, scalar_prefetch = 0 : i64, scratch_operands = 0 : i64, tpu.core_type = #tpu.core_type<tc>, window_params = [{transform_indices = @transform_0, window_bounds = array<i64: 512, 10>}, {pipeline_mode = #tpu.pipeline_mode<synchronous>, transform_indices = @transform_1, window_bounds = array<i64: 55, 10>}, {pipeline_mode = #tpu.pipeline_mode<synchronous>, transform_indices = @transform_2, window_bounds = array<i64: 55, 1>}, {pipeline_mode = #tpu.pipeline_mode<synchronous>, transform_indices = @transform_3, window_bounds = array<i64: 20, 55>}, {pipeline_mode = #tpu.pipeline_mode<synchronous>, transform_indices = @transform_4, window_bounds = array<i64: 20, 1>}, {pipeline_mode = #tpu.pipeline_mode<synchronous>, transform_indices = @transform_5, window_bounds = array<i64: 1, 20>}, {pipeline_mode = #tpu.pipeline_mode<synchronous>, transform_indices = @transform_6, window_bounds = array<i64: 1, 1>}, {transform_indices = @transform_7, window_bounds = array<i64: 1, 1, 512>}]} {
    %c0 = arith.constant 0 : index
    %c0_0 = arith.constant 0 : index
    %0 = vector.load %arg2[%c0, %c0_0] : memref<55x10xf32, #tpu.memory_space<vmem>>, vector<55x10xf32>
    %c0_1 = arith.constant 0 : index
    %c0_2 = arith.constant 0 : index
    %1 = vector.load %arg3[%c0_1, %c0_2] : memref<55x1xf32, #tpu.memory_space<vmem>>, vector<55x1xf32>
    %c0_3 = arith.constant 0 : index
    %c0_4 = arith.constant 0 : index
    %2 = vector.load %arg4[%c0_3, %c0_4] : memref<20x55xf32, #tpu.memory_space<vmem>>, vector<20x55xf32>
    %c0_5 = arith.constant 0 : index
    %c0_6 = arith.constant 0 : index
    %3 = vector.load %arg5[%c0_5, %c0_6] : memref<20x1xf32, #tpu.memory_space<vmem>>, vector<20x1xf32>
    %c0_7 = arith.constant 0 : index
    %c0_8 = arith.constant 0 : index
    %4 = vector.load %arg6[%c0_7, %c0_8] : memref<1x20xf32, #tpu.memory_space<vmem>>, vector<1x20xf32>
    %c0_9 = arith.constant 0 : index
    %c0_10 = arith.constant 0 : index
    %5 = vector.load %arg7[%c0_9, %c0_10] : memref<1x1xf32, #tpu.memory_space<vmem>>, vector<1x1xf32>
    %c0_i32 = arith.constant 0 : i32
    %c512_i32 = arith.constant 512 : i32
    %6 = arith.muli %c0_i32, %c512_i32 : i32
    %7 = tpu.assume_multiple %6, 512 : i32
    %8 = arith.index_cast %7 : i32 to index
    %c0_11 = arith.constant 0 : index
    %9 = vector.load %arg1[%8, %c0_11] : memref<512x10xf32, #tpu.memory_space<vmem>>, vector<512x10xf32>
    %cst = arith.constant dense<0.000000e+00> : vector<55x512xf32>
    %10 = tpu.matmul %0, %9, %cst {dimension_numbers = #tpu.dot_dimension_numbers<[1], [1], [0], [0], [0, 0, 1, 0], [], []>} : vector<55x10xf32>, vector<512x10xf32>, vector<55x512xf32> -> vector<55x512xf32>
    %11 = vector.broadcast %1 : vector<55x1xf32> to vector<55x512xf32>
    %12 = arith.addf %10, %11 : vector<55x512xf32>
    %cst_12 = arith.constant 0.000000e+00 : f32
    %13 = vector.broadcast %cst_12 : f32 to vector<55x512xf32>
    %14 = arith.maximumf %12, %13 : vector<55x512xf32>
    %cst_13 = arith.constant dense<0.000000e+00> : vector<20x512xf32>
    %15 = tpu.matmul %2, %14, %cst_13 {dimension_numbers = #tpu.dot_dimension_numbers<[1], [0], [0], [1], [0, 0, 1, 1], [], []>} : vector<20x55xf32>, vector<55x512xf32>, vector<20x512xf32> -> vector<20x512xf32>
    %16 = vector.broadcast %3 : vector<20x1xf32> to vector<20x512xf32>
    %17 = arith.addf %15, %16 : vector<20x512xf32>
    %cst_14 = arith.constant 0.000000e+00 : f32
    %18 = vector.broadcast %cst_14 : f32 to vector<20x512xf32>
    %19 = arith.maximumf %17, %18 : vector<20x512xf32>
    %cst_15 = arith.constant dense<0.000000e+00> : vector<1x512xf32>
    %20 = tpu.matmul %4, %19, %cst_15 {dimension_numbers = #tpu.dot_dimension_numbers<[1], [0], [0], [1], [0, 0, 1, 1], [], []>} : vector<1x20xf32>, vector<20x512xf32>, vector<1x512xf32> -> vector<1x512xf32>
    %21 = vector.broadcast %5 : vector<1x1xf32> to vector<1x512xf32>
    %22 = arith.addf %20, %21 : vector<1x512xf32>
    %23 = math.absf %22 : vector<1x512xf32>
    %cst_16 = arith.constant 0.000000e+00 : f32
    %24 = vector.broadcast %cst_16 : f32 to vector<1x512xf32>
    %25 = arith.subf %24, %23 : vector<1x512xf32>
    %26 = math.exp %25 : vector<1x512xf32>
    %cst_17 = arith.constant 1.000000e+00 : f32
    %27 = vector.broadcast %cst_17 : f32 to vector<1x512xf32>
    %28 = arith.addf %27, %26 : vector<1x512xf32>
    %29 = tpu.reciprocal %28 : vector<1x512xf32> -> vector<1x512xf32>
    %cst_18 = arith.constant 0.000000e+00 : f32
    %30 = vector.broadcast %cst_18 : f32 to vector<1x512xf32>
    %31 = arith.cmpf oge, %22, %30 : vector<1x512xf32>
    %32 = arith.mulf %26, %29 : vector<1x512xf32>
    %33 = arith.select %31, %29, %32 : vector<1x512xi1>, vector<1x512xf32>
    %34 = arith.index_cast %c0_i32 : i32 to index
    %c0_19 = arith.constant 0 : index
    %c0_20 = arith.constant 0 : index
    %35 = vector.load %arg8[%34, %c0_19, %c0_20] : memref<1x1x512xf32, #tpu.memory_space<vmem>>, vector<1x1x512xf32>
    %36 = vector.shape_cast %35 : vector<1x1x512xf32> to vector<1x512xf32>
    %37 = vector.shape_cast %33 : vector<1x512xf32> to vector<1x1x512xf32>
    tpu.vector_store %arg8[%34, %c0_19, %c0_20], %37 {strides = array<i32>} : memref<1x1x512xf32, #tpu.memory_space<vmem>>, vector<1x1x512xf32>,
    %c1_i32 = arith.constant 1 : i32
    return
  }
  func.func @transform_0(%arg0: i32) -> (i32, i32) {
    %c0_i32 = arith.constant 0 : i32
    %c0_i32_0 = arith.constant 0 : i32
    return %arg0, %c0_i32 : i32, i32
  }
  func.func @transform_1(%arg0: i32) -> (i32, i32) {
    %c0_i32 = arith.constant 0 : i32
    %c0_i32_0 = arith.constant 0 : i32
    %c0_i32_1 = arith.constant 0 : i32
    return %c0_i32, %c0_i32_0 : i32, i32
  }
  func.func @transform_2(%arg0: i32) -> (i32, i32) {
    %c0_i32 = arith.constant 0 : i32
    %c0_i32_0 = arith.constant 0 : i32
    %c0_i32_1 = arith.constant 0 : i32
    return %c0_i32, %c0_i32_0 : i32, i32
  }
  func.func @transform_3(%arg0: i32) -> (i32, i32) {
    %c0_i32 = arith.constant 0 : i32
    %c0_i32_0 = arith.constant 0 : i32
    %c0_i32_1 = arith.constant 0 : i32
    return %c0_i32, %c0_i32_0 : i32, i32
  }
  func.func @transform_4(%arg0: i32) -> (i32, i32) {
    %c0_i32 = arith.constant 0 : i32
    %c0_i32_0 = arith.constant 0 : i32
    %c0_i32_1 = arith.constant 0 : i32
    return %c0_i32, %c0_i32_0 : i32, i32
  }
  func.func @transform_5(%arg0: i32) -> (i32, i32) {
    %c0_i32 = arith.constant 0 : i32
    %c0_i32_0 = arith.constant 0 : i32
    %c0_i32_1 = arith.constant 0 : i32
    return %c0_i32, %c0_i32_0 : i32, i32
  }
  func.func @transform_6(%arg0: i32) -> (i32, i32) {
    %c0_i32 = arith.constant 0 : i32
    %c0_i32_0 = arith.constant 0 : i32
    %c0_i32_1 = arith.constant 0 : i32
    return %c0_i32, %c0_i32_0 : i32, i32
  }
  func.func @transform_7(%arg0: i32) -> (i32, i32, i32) {
    %c0_i32 = arith.constant 0 : i32
    %c0_i32_0 = arith.constant 0 : i32
    %c0_i32_1 = arith.constant 0 : i32
    return %arg0, %c0_i32, %c0_i32_0 : i32, i32, i32
  }
}

</mosaic_0001>

<llo_original>
// kernel: tpu_custom_call.1
$region0: #{tpu_custom_call.1}
  #allocation0 [shape = 'u32[]', space=smem, size = 0x4, offset = 0x4, fixed_abs, tag = 'smem constant byte address 0x4 - core index']
  #allocation1 [shape = 'u32[144,128]{1,0:T(1,128)}', space=vmem, size = 0x12000, scoped, tag = 'internal scratch']
  #allocation2 [shape = 'f32[1,1]{1,0:T(1,128)S(1)}', space=vmem, size = 0x200, scoped, tag = 'scoped memory for tpu_custom_call.1']
  %s0 = inlined_call_operand.vmem [shape: f32[512,10], index: 0, kind: input, shape index: {}]
  %s1 = inlined_call_operand.vmem [shape: f32[55,10], index: 1, kind: input, shape index: {}]
  %s2 = inlined_call_operand.vmem [shape: f32[55,1], index: 2, kind: input, shape index: {}]
  %s3 = inlined_call_operand.vmem [shape: f32[20,55], index: 3, kind: input, shape index: {}]
  %s4 = inlined_call_operand.vmem [shape: f32[20,1], index: 4, kind: input, shape index: {}]
  %s5 = inlined_call_operand.vmem [shape: f32[1,20], index: 5, kind: input, shape index: {}]
  %s6 = inlined_call_operand.<no memory space> [shape: f32[1,1], index: 6, kind: input, shape index: {}]
  %s7 = inlined_call_operand.hbm [shape: f32[1,1,512], index: 7, kind: output, shape index: {}]
  %s8 = sld [smem:[#allocation0]]
  $region38: #{tpu_custom_call.1} parent=0
    _
  %s10 = ssub.s32 1, %s8
  %s11 = scalar_select 0, %s10, %s8
  %v12 = vstv %s6
  %13 = vst [vmem:[#allocation2] sm:$0x1] %v12
  $region1: #{tpu_custom_call.1} parent=0
    #allocation3 [shape = 'u8[2048]{0}', space=vmem, size = 0x800, scoped, tag = 'output window, operand 0, single buffered']
    #allocation4 [shape = 's32[1]{0}', space=sflag, size = 0x4, scoped, tag = 'scoped memory for tpu_custom_call.1']
    %14 = vsyncpa [#allocation4], 0
    // Predicated region
    $region2: #{tpu_custom_call.1} parent=1 // pred_check
      _
    $region3: #{tpu_custom_call.1} parent=1 // pred_check_branch
      %16 = sbr.rel (0) target = $region5
    $region4: #{tpu_custom_call.1} parent=1 // pred_region
      _
    $region5: #{tpu_custom_call.1} parent=1 // pred_fallthru
      _
    // Predicated region
    $region6: #{tpu_custom_call.1} parent=1 // pred_check
      _
    $region7: #{tpu_custom_call.1} parent=1 // pred_check_branch
      %18 = sbr.rel (0) target = $region9
    $region8: #{tpu_custom_call.1} parent=1 // pred_region
      _
    $region9: #{tpu_custom_call.1} parent=1 // pred_fallthru
      _
    // Predicated region
    $region10: #{tpu_custom_call.1} parent=1 // pred_check
      _
    $region11: #{tpu_custom_call.1} parent=1 // pred_check_branch
      %20 = sbr.rel (0) target = $region13
    $region12: #{tpu_custom_call.1} parent=1 // pred_region
      _
    $region13: #{tpu_custom_call.1} parent=1 // pred_fallthru
      _
    // Predicated region
    $region14: #{tpu_custom_call.1} parent=1 // pred_check
      _
    $region15: #{tpu_custom_call.1} parent=1 // pred_check_branch
      %22 = sbr.rel (0) target = $region17
    $region16: #{tpu_custom_call.1} parent=1 // pred_region
      _
    $region17: #{tpu_custom_call.1} parent=1 // pred_fallthru
      _
    // Predicated region
    $region18: #{tpu_custom_call.1} parent=1 // pred_check
      _
    $region19: #{tpu_custom_call.1} parent=1 // pred_check_branch
      %24 = sbr.rel (0) target = $region21
    $region20: #{tpu_custom_call.1} parent=1 // pred_region
      _
    $region21: #{tpu_custom_call.1} parent=1 // pred_fallthru
      _
    // Predicated region
    $region22: #{tpu_custom_call.1} parent=1 // pred_check
      _
    $region23: #{tpu_custom_call.1} parent=1 // pred_check_branch
      %26 = sbr.rel (0) target = $region25
    $region24: #{tpu_custom_call.1} parent=1 // pred_region
      _
    $region25: #{tpu_custom_call.1} parent=1 // pred_fallthru
      _
    // Predicated region
    $region26: #{tpu_custom_call.1} parent=1 // pred_check
      _
    $region27: #{tpu_custom_call.1} parent=1 // pred_check_branch
      %28 = sbr.rel (0) target = $region29
    $region28: #{tpu_custom_call.1} parent=1 // pred_region
      _
    $region29: #{tpu_custom_call.1} parent=1 // pred_fallthru
      _
    %v29 = vld [vmem:[%s1] sm:$0xff]
    %v30 = vld [vmem:[%s1 + $0x8] sm:$0xff]
    %v31 = vld [vmem:[%s1 + $0x10] sm:$0xff]
    %v32 = vld [vmem:[%s1 + $0x18] sm:$0xff]
    %v33 = vld [vmem:[%s1 + $0x20] sm:$0xff]
    %v34 = vld [vmem:[%s1 + $0x28] sm:$0xff]
    %v35 = vld [vmem:[%s1 + $0x30] sm:$0x7f]
    %v36 = vld [vmem:[%s2] sm:$0xff]
    %v37 = vld [vmem:[%s2 + $0x8] sm:$0xff]
    %v38 = vld [vmem:[%s2 + $0x10] sm:$0xff]
    %v39 = vld [vmem:[%s2 + $0x18] sm:$0xff]
    %v40 = vld [vmem:[%s2 + $0x20] sm:$0xff]
    %v41 = vld [vmem:[%s2 + $0x28] sm:$0xff]
    %v42 = vld [vmem:[%s2 + $0x30] sm:$0x7f]
    %v43 = vld [vmem:[%s3] sm:$0xff]
    %v44 = vld [vmem:[%s3 + $0x8] sm:$0xff]
    %v45 = vld [vmem:[%s3 + $0x10] sm:$0xf]
    %v46 = vld [vmem:[%s4] sm:$0xff]
    %v47 = vld [vmem:[%s4 + $0x8] sm:$0xff]
    %v48 = vld [vmem:[%s4 + $0x10] sm:$0xf]
    %v49 = vld [vmem:[%s5] sm:$0x1]
    %v50 = vld [vmem:[#allocation2] sm:$0x1]
    %v51 = vld [vmem:[%s0] sm:$0xff]
    %v52 = vld [vmem:[%s0 + $0x8] sm:$0xff]
    %v53 = vld [vmem:[%s0 + $0x10] sm:$0xff]
    %v54 = vld [vmem:[%s0 + $0x18] sm:$0xff]
    %v55 = vld [vmem:[%s0 + $0x20] sm:$0xff]
    %v56 = vld [vmem:[%s0 + $0x28] sm:$0xff]
    %v57 = vld [vmem:[%s0 + $0x30] sm:$0xff]
    %v58 = vld [vmem:[%s0 + $0x38] sm:$0xff]
    %v59 = vld [vmem:[%s0 + $0x40] sm:$0xff]
    %v60 = vld [vmem:[%s0 + $0x48] sm:$0xff]
    %v61 = vld [vmem:[%s0 + $0x50] sm:$0xff]
    %v62 = vld [vmem:[%s0 + $0x58] sm:$0xff]
    %v63 = vld [vmem:[%s0 + $0x60] sm:$0xff]
    %v64 = vld [vmem:[%s0 + $0x68] sm:$0xff]
    %v65 = vld [vmem:[%s0 + $0x70] sm:$0xff]
    %v66 = vld [vmem:[%s0 + $0x78] sm:$0xff]
    %v67 = vld [vmem:[%s0 + $0x80] sm:$0xff]
    %v68 = vld [vmem:[%s0 + $0x88] sm:$0xff]
    %v69 = vld [vmem:[%s0 + $0x90] sm:$0xff]
    %v70 = vld [vmem:[%s0 + $0x98] sm:$0xff]
    %v71 = vld [vmem:[%s0 + $0xa0] sm:$0xff]
    %v72 = vld [vmem:[%s0 + $0xa8] sm:$0xff]
    %v73 = vld [vmem:[%s0 + $0xb0] sm:$0xff]
    %v74 = vld [vmem:[%s0 + $0xb8] sm:$0xff]
    %v75 = vld [vmem:[%s0 + $0xc0] sm:$0xff]
    %v76 = vld [vmem:[%s0 + $0xc8] sm:$0xff]
    %v77 = vld [vmem:[%s0 + $0xd0] sm:$0xff]
    %v78 = vld [vmem:[%s0 + $0xd8] sm:$0xff]
    %v79 = vld [vmem:[%s0 + $0xe0] sm:$0xff]
    %v80 = vld [vmem:[%s0 + $0xe8] sm:$0xff]
    %v81 = vld [vmem:[%s0 + $0xf0] sm:$0xff]
    %v82 = vld [vmem:[%s0 + $0xf8] sm:$0xff]
    %v83 = vld [vmem:[%s0 + $0x100] sm:$0xff]
    %v84 = vld [vmem:[%s0 + $0x108] sm:$0xff]
    %v85 = vld [vmem:[%s0 + $0x110] sm:$0xff]
    %v86 = vld [vmem:[%s0 + $0x118] sm:$0xff]
    %v87 = vld [vmem:[%s0 + $0x120] sm:$0xff]
    %v88 = vld [vmem:[%s0 + $0x128] sm:$0xff]
    %v89 = vld [vmem:[%s0 + $0x130] sm:$0xff]
    %v90 = vld [vmem:[%s0 + $0x138] sm:$0xff]
    %v91 = vld [vmem:[%s0 + $0x140] sm:$0xff]
    %v92 = vld [vmem:[%s0 + $0x148] sm:$0xff]
    %v93 = vld [vmem:[%s0 + $0x150] sm:$0xff]
    %v94 = vld [vmem:[%s0 + $0x158] sm:$0xff]
    %v95 = vld [vmem:[%s0 + $0x160] sm:$0xff]
    %v96 = vld [vmem:[%s0 + $0x168] sm:$0xff]
    %v97 = vld [vmem:[%s0 + $0x170] sm:$0xff]
    %v98 = vld [vmem:[%s0 + $0x178] sm:$0xff]
    %v99 = vld [vmem:[%s0 + $0x180] sm:$0xff]
    %v100 = vld [vmem:[%s0 + $0x188] sm:$0xff]
    %v101 = vld [vmem:[%s0 + $0x190] sm:$0xff]
    %v102 = vld [vmem:[%s0 + $0x198] sm:$0xff]
    %v103 = vld [vmem:[%s0 + $0x1a0] sm:$0xff]
    %v104 = vld [vmem:[%s0 + $0x1a8] sm:$0xff]
    %v105 = vld [vmem:[%s0 + $0x1b0] sm:$0xff]
    %v106 = vld [vmem:[%s0 + $0x1b8] sm:$0xff]
    %v107 = vld [vmem:[%s0 + $0x1c0] sm:$0xff]
    %v108 = vld [vmem:[%s0 + $0x1c8] sm:$0xff]
    %v109 = vld [vmem:[%s0 + $0x1d0] sm:$0xff]
    %v110 = vld [vmem:[%s0 + $0x1d8] sm:$0xff]
    %v111 = vld [vmem:[%s0 + $0x1e0] sm:$0xff]
    %v112 = vld [vmem:[%s0 + $0x1e8] sm:$0xff]
    %v113 = vld [vmem:[%s0 + $0x1f0] sm:$0xff]
    %v114 = vld [vmem:[%s0 + $0x1f8] sm:$0xff]
    %116 = vset.pattern.permute.xlu0 0
    %117 = vperm.xlu0 %116, %v36
    %v118 = vpop.permute.xlu0 %117
    %121 = vset.pattern.permute.xlu0 0
    %122 = vperm.xlu0 %121, %v37
    %v123 = vpop.permute.xlu0 %122
    %126 = vset.pattern.permute.xlu0 0
    %127 = vperm.xlu0 %126, %v38
    %v128 = vpop.permute.xlu0 %127
    %131 = vset.pattern.permute.xlu0 0
    %132 = vperm.xlu0 %131, %v39
    %v133 = vpop.permute.xlu0 %132
    %136 = vset.pattern.permute.xlu0 0
    %137 = vperm.xlu0 %136, %v40
    %v138 = vpop.permute.xlu0 %137
    %141 = vset.pattern.permute.xlu0 0
    %142 = vperm.xlu0 %141, %v41
    %v143 = vpop.permute.xlu0 %142
    %146 = vset.pattern.permute.xlu0 0
    %147 = vperm.xlu0 %146, %v42
    %v148 = vpop.permute.xlu0 %147
    %vm150 = vcmask 80896
    %v152 = vsel %vm150, %v29, 0
    %v155 = vsel %vm150, %v30, 0
    %v158 = vsel %vm150, %v31, 0
    %v161 = vsel %vm150, %v32, 0
    %v164 = vsel %vm150, %v33, 0
    %v167 = vsel %vm150, %v34, 0
    %v170 = vsel %vm150, %v35, 0
    %v173 = vsel %vm150, %v51, 0
    %v176 = vsel %vm150, %v52, 0
    %v179 = vsel %vm150, %v53, 0
    %v182 = vsel %vm150, %v54, 0
    %v185 = vsel %vm150, %v55, 0
    %v188 = vsel %vm150, %v56, 0
    %v191 = vsel %vm150, %v57, 0
    %v194 = vsel %vm150, %v58, 0
    %v197 = vsel %vm150, %v59, 0
    %v200 = vsel %vm150, %v60, 0
    %v203 = vsel %vm150, %v61, 0
    %v206 = vsel %vm150, %v62, 0
    %v209 = vsel %vm150, %v63, 0
    %v212 = vsel %vm150, %v64, 0
    %v215 = vsel %vm150, %v65, 0
    %v218 = vsel %vm150, %v66, 0
    %v221 = vsel %vm150, %v67, 0
    %v224 = vsel %vm150, %v68, 0
    %v227 = vsel %vm150, %v69, 0
    %v230 = vsel %vm150, %v70, 0
    %v233 = vsel %vm150, %v71, 0
    %v236 = vsel %vm150, %v72, 0
    %v239 = vsel %vm150, %v73, 0
    %v242 = vsel %vm150, %v74, 0
    %v245 = vsel %vm150, %v75, 0
    %v248 = vsel %vm150, %v76, 0
    %v251 = vsel %vm150, %v77, 0
    %v254 = vsel %vm150, %v78, 0
    %v257 = vsel %vm150, %v79, 0
    %v260 = vsel %vm150, %v80, 0
    %v263 = vsel %vm150, %v81, 0
    %v266 = vsel %vm150, %v82, 0
    %v269 = vsel %vm150, %v83, 0
    %v272 = vsel %vm150, %v84, 0
    %v275 = vsel %vm150, %v85, 0
    %v278 = vsel %vm150, %v86, 0
    %v281 = vsel %vm150, %v87, 0
    %v284 = vsel %vm150, %v88, 0
    %v287 = vsel %vm150, %v89, 0
    %v290 = vsel %vm150, %v90, 0
    %v293 = vsel %vm150, %v91, 0
    %v296 = vsel %vm150, %v92, 0
    %v299 = vsel %vm150, %v93, 0
    %v302 = vsel %vm150, %v94, 0
    %v305 = vsel %vm150, %v95, 0
    %v308 = vsel %vm150, %v96, 0
    %v311 = vsel %vm150, %v97, 0
    %v314 = vsel %vm150, %v98, 0
    %v317 = vsel %vm150, %v99, 0
    %v320 = vsel %vm150, %v100, 0
    %v323 = vsel %vm150, %v101, 0
    %v326 = vsel %vm150, %v102, 0
    %v329 = vsel %vm150, %v103, 0
    %v332 = vsel %vm150, %v104, 0
    %v335 = vsel %vm150, %v105, 0
    %v338 = vsel %vm150, %v106, 0
    %v341 = vsel %vm150, %v107, 0
    %v344 = vsel %vm150, %v108, 0
    %v347 = vsel %vm150, %v109, 0
    %v350 = vsel %vm150, %v110, 0
    %v353 = vsel %vm150, %v111, 0
    %v356 = vsel %vm150, %v112, 0
    %v359 = vsel %vm150, %v113, 0
    %v362 = vsel %vm150, %v114, 0
    %364 = vmatprep.subr.mxu0 0.0
    %365 = vmatpush1.xpose.msra.mxu0 %v173
    %366 = vmatprep.subr.mxu0 0.0
    %367 = vmatpush1.xpose.msra.mxu0 %v176
    %368 = vmatprep.subr.mxu0 0.0
    %369 = vmatpush1.xpose.msra.mxu0 %v179
    %370 = vmatprep.subr.mxu0 0.0
    %371 = vmatpush1.xpose.msra.mxu0 %v182
    %372 = vmatprep.subr.mxu0 0.0
    %373 = vmatpush1.xpose.msra.mxu0 %v185
    %374 = vmatprep.subr.mxu0 0.0
    %375 = vmatpush1.xpose.msra.mxu0 %v188
    %376 = vmatprep.subr.mxu0 0.0
    %377 = vmatpush1.xpose.msra.mxu0 %v191
    %378 = vmatprep.subr.mxu0 0.0
    %379 = vmatpush1.xpose.msra.mxu0 %v194
    %380 = vmatprep.subr.mxu0 0.0
    %381 = vmatpush1.xpose.msra.mxu0 %v197
    %382 = vmatprep.subr.mxu0 0.0
    %383 = vmatpush1.xpose.msra.mxu0 %v200
    %384 = vmatprep.subr.mxu0 0.0
    %385 = vmatpush1.xpose.msra.mxu0 %v203
    %386 = vmatprep.subr.mxu0 0.0
    %387 = vmatpush1.xpose.msra.mxu0 %v206
    %388 = vmatprep.subr.mxu0 0.0
    %389 = vmatpush1.xpose.msra.mxu0 %v209
    %390 = vmatprep.subr.mxu0 0.0
    %391 = vmatpush1.xpose.msra.mxu0 %v212
    %392 = vmatprep.subr.mxu0 0.0
    %393 = vmatpush1.xpose.msra.mxu0 %v215
    %394 = vmatprep.subr.mxu0 0.0
    %395 = vmatpush1.xpose.msra.mxu0 %v218
    %396 = vmatprep.subr.mxu0 0.0
    %397 = vmatpush1.xpose.msra.mxu0 %v221
    %398 = vmatprep.subr.mxu0 0.0
    %399 = vmatpush1.xpose.msra.mxu0 %v224
    %400 = vmatprep.subr.mxu0 0.0
    %401 = vmatpush1.xpose.msra.mxu0 %v227
    %402 = vmatprep.subr.mxu0 0.0
    %403 = vmatpush1.xpose.msra.mxu0 %v230
    %404 = vmatprep.subr.mxu0 0.0
    %405 = vmatpush1.xpose.msra.mxu0 %v233
    %406 = vmatprep.subr.mxu0 0.0
    %407 = vmatpush1.xpose.msra.mxu0 %v236
    %408 = vmatprep.subr.mxu0 0.0
    %409 = vmatpush1.xpose.msra.mxu0 %v239
    %410 = vmatprep.subr.mxu0 0.0
    %411 = vmatpush1.xpose.msra.mxu0 %v242
    %412 = vmatprep.subr.mxu0 0.0
    %413 = vmatpush1.xpose.msra.mxu0 %v245
    %414 = vmatprep.subr.mxu0 0.0
    %415 = vmatpush1.xpose.msra.mxu0 %v248
    %416 = vmatprep.subr.mxu0 0.0
    %417 = vmatpush1.xpose.msra.mxu0 %v251
    %418 = vmatprep.subr.mxu0 0.0
    %419 = vmatpush1.xpose.msra.mxu0 %v254
    %420 = vmatprep.subr.mxu0 0.0
    %421 = vmatpush1.xpose.msra.mxu0 %v257
    %422 = vmatprep.subr.mxu0 0.0
    %423 = vmatpush1.xpose.msra.mxu0 %v260
    %424 = vmatprep.subr.mxu0 0.0
    %425 = vmatpush1.xpose.msra.mxu0 %v263
    %426 = vmatprep.subr.mxu0 0.0
    %427 = vmatpush1.xpose.msra.mxu0 %v266
    %428 = vmatprep.mubr.f32.mxu0 0.0
    %429 = vmatmul.mubr.f32.gmra.mrb[0].mxu0 %v152
    %v430 = vpop.f32.mrb[0].mxu0
    %v431 = vadd.f32 %v118, %v430
    %v432 = vpop.f32.mrb[0].mxu0
    %v433 = vadd.f32 %v118, %v432
    %434 = vmatprep.mubr.f32.mxu0 0.0
    %435 = vmatmul.mubr.f32.gmra.mrb[0].mxu0 %v155
    %v436 = vpop.f32.mrb[0].mxu0
    %v437 = vadd.f32 %v123, %v436
    %v438 = vpop.f32.mrb[0].mxu0
    %v439 = vadd.f32 %v123, %v438
    %440 = vmatprep.mubr.f32.mxu0 0.0
    %441 = vmatmul.mubr.f32.gmra.mrb[0].mxu0 %v158
    %v442 = vpop.f32.mrb[0].mxu0
    %v443 = vadd.f32 %v128, %v442
    %v444 = vpop.f32.mrb[0].mxu0
    %v445 = vadd.f32 %v128, %v444
    %446 = vmatprep.mubr.f32.mxu0 0.0
    %447 = vmatmul.mubr.f32.gmra.mrb[0].mxu0 %v161
    %v448 = vpop.f32.mrb[0].mxu0
    %v449 = vadd.f32 %v133, %v448
    %v450 = vpop.f32.mrb[0].mxu0
    %v451 = vadd.f32 %v133, %v450
    %452 = vmatprep.mubr.f32.mxu0 0.0
    %453 = vmatmul.mubr.f32.gmra.mrb[0].mxu0 %v164
    %v454 = vpop.f32.mrb[0].mxu0
    %v455 = vadd.f32 %v138, %v454
    %v456 = vpop.f32.mrb[0].mxu0
    %v457 = vadd.f32 %v138, %v456
    %458 = vmatprep.mubr.f32.mxu0 0.0
    %459 = vmatmul.mubr.f32.gmra.mrb[0].mxu0 %v167
    %v460 = vpop.f32.mrb[0].mxu0
    %v461 = vadd.f32 %v143, %v460
    %v462 = vpop.f32.mrb[0].mxu0
    %v463 = vadd.f32 %v143, %v462
    %464 = vmatprep.mubr.f32.mxu0 0.0
    %465 = vmatmul.mubr.f32.gmra.mrb[0].mxu0 %v170
    %v466 = vpop.f32.mrb[0].mxu0
    %v467 = vadd.f32 %v148, %v466
    %v468 = vpop.f32.mrb[0].mxu0
    %v469 = vadd.f32 %v148, %v468
    %470 = vdwg.mxu0
    %471 = vmatprep.subr.mxu0 0.0
    %472 = vmatpush1.xpose.msra.mxu0 %v269
    %473 = vmatprep.subr.mxu0 0.0
    %474 = vmatpush1.xpose.msra.mxu0 %v272
    %475 = vmatprep.subr.mxu0 0.0
    %476 = vmatpush1.xpose.msra.mxu0 %v275
    %477 = vmatprep.subr.mxu0 0.0
    %478 = vmatpush1.xpose.msra.mxu0 %v278
    %479 = vmatprep.subr.mxu0 0.0
    %480 = vmatpush1.xpose.msra.mxu0 %v281
    %481 = vmatprep.subr.mxu0 0.0
    %482 = vmatpush1.xpose.msra.mxu0 %v284
    %483 = vmatprep.subr.mxu0 0.0
    %484 = vmatpush1.xpose.msra.mxu0 %v287
    %485 = vmatprep.subr.mxu0 0.0
    %486 = vmatpush1.xpose.msra.mxu0 %v290
    %487 = vmatprep.subr.mxu0 0.0
    %488 = vmatpush1.xpose.msra.mxu0 %v293
    %489 = vmatprep.subr.mxu0 0.0
    %490 = vmatpush1.xpose.msra.mxu0 %v296
    %491 = vmatprep.subr.mxu0 0.0
    %492 = vmatpush1.xpose.msra.mxu0 %v299
    %493 = vmatprep.subr.mxu0 0.0
    %494 = vmatpush1.xpose.msra.mxu0 %v302
    %495 = vmatprep.subr.mxu0 0.0
    %496 = vmatpush1.xpose.msra.mxu0 %v305
    %497 = vmatprep.subr.mxu0 0.0
    %498 = vmatpush1.xpose.msra.mxu0 %v308
    %499 = vmatprep.subr.mxu0 0.0
    %500 = vmatpush1.xpose.msra.mxu0 %v311
    %501 = vmatprep.subr.mxu0 0.0
    %502 = vmatpush1.xpose.msra.mxu0 %v314
    %503 = vmatprep.subr.mxu0 0.0
    %504 = vmatpush1.xpose.msra.mxu0 %v317
    %505 = vmatprep.subr.mxu0 0.0
    %506 = vmatpush1.xpose.msra.mxu0 %v320
    %507 = vmatprep.subr.mxu0 0.0
    %508 = vmatpush1.xpose.msra.mxu0 %v323
    %509 = vmatprep.subr.mxu0 0.0
    %510 = vmatpush1.xpose.msra.mxu0 %v326
    %511 = vmatprep.subr.mxu0 0.0
    %512 = vmatpush1.xpose.msra.mxu0 %v329
    %513 = vmatprep.subr.mxu0 0.0
    %514 = vmatpush1.xpose.msra.mxu0 %v332
    %515 = vmatprep.subr.mxu0 0.0
    %516 = vmatpush1.xpose.msra.mxu0 %v335
    %517 = vmatprep.subr.mxu0 0.0
    %518 = vmatpush1.xpose.msra.mxu0 %v338
    %519 = vmatprep.subr.mxu0 0.0
    %520 = vmatpush1.xpose.msra.mxu0 %v341
    %521 = vmatprep.subr.mxu0 0.0
    %522 = vmatpush1.xpose.msra.mxu0 %v344
    %523 = vmatprep.subr.mxu0 0.0
    %524 = vmatpush1.xpose.msra.mxu0 %v347
    %525 = vmatprep.subr.mxu0 0.0
    %526 = vmatpush1.xpose.msra.mxu0 %v350
    %527 = vmatprep.subr.mxu0 0.0
    %528 = vmatpush1.xpose.msra.mxu0 %v353
    %529 = vmatprep.subr.mxu0 0.0
    %530 = vmatpush1.xpose.msra.mxu0 %v356
    %531 = vmatprep.subr.mxu0 0.0
    %532 = vmatpush1.xpose.msra.mxu0 %v359
    %533 = vmatprep.subr.mxu0 0.0
    %534 = vmatpush1.xpose.msra.mxu0 %v362
    %535 = vmatprep.mubr.f32.mxu0 0.0
    %536 = vmatmul.mubr.f32.gmra.mrb[0].mxu0 %v152
    %v537 = vpop.f32.mrb[0].mxu0
    %v538 = vadd.f32 %v118, %v537
    %v539 = vpop.f32.mrb[0].mxu0
    %v540 = vadd.f32 %v118, %v539
    %541 = vmatprep.mubr.f32.mxu0 0.0
    %542 = vmatmul.mubr.f32.gmra.mrb[0].mxu0 %v155
    %v543 = vpop.f32.mrb[0].mxu0
    %v544 = vadd.f32 %v123, %v543
    %v545 = vpop.f32.mrb[0].mxu0
    %v546 = vadd.f32 %v123, %v545
    %547 = vmatprep.mubr.f32.mxu0 0.0
    %548 = vmatmul.mubr.f32.gmra.mrb[0].mxu0 %v158
    %v549 = vpop.f32.mrb[0].mxu0
    %v550 = vadd.f32 %v128, %v549
    %v551 = vpop.f32.mrb[0].mxu0
    %v552 = vadd.f32 %v128, %v551
    %553 = vmatprep.mubr.f32.mxu0 0.0
    %554 = vmatmul.mubr.f32.gmra.mrb[0].mxu0 %v161
    %v555 = vpop.f32.mrb[0].mxu0
    %v556 = vadd.f32 %v133, %v555
    %v557 = vpop.f32.mrb[0].mxu0
    %v558 = vadd.f32 %v133, %v557
    %559 = vmatprep.mubr.f32.mxu0 0.0
    %560 = vmatmul.mubr.f32.gmra.mrb[0].mxu0 %v164
    %v561 = vpop.f32.mrb[0].mxu0
    %v562 = vadd.f32 %v138, %v561
    %v563 = vpop.f32.mrb[0].mxu0
    %v564 = vadd.f32 %v138, %v563
    %565 = vmatprep.mubr.f32.mxu0 0.0
    %566 = vmatmul.mubr.f32.gmra.mrb[0].mxu0 %v167
    %v567 = vpop.f32.mrb[0].mxu0
    %v568 = vadd.f32 %v143, %v567
    %v569 = vpop.f32.mrb[0].mxu0
    %v570 = vadd.f32 %v143, %v569
    %571 = vmatprep.mubr.f32.mxu0 0.0
    %572 = vmatmul.mubr.f32.gmra.mrb[0].mxu0 %v170
    %v573 = vpop.f32.mrb[0].mxu0
    %v574 = vadd.f32 %v148, %v573
    %v575 = vpop.f32.mrb[0].mxu0
    %v576 = vadd.f32 %v148, %v575
    %577 = vdwg.mxu0
    %v578 = vmax.f32 %v431, 0.0
    %v579 = vmax.f32 %v433, 0.0
    %v580 = vmax.f32 %v538, 0.0
    %v581 = vmax.f32 %v540, 0.0
    %v582 = vmax.f32 %v437, 0.0
    %v583 = vmax.f32 %v439, 0.0
    %v584 = vmax.f32 %v544, 0.0
    %v585 = vmax.f32 %v546, 0.0
    %v586 = vmax.f32 %v443, 0.0
    %v587 = vmax.f32 %v445, 0.0
    %v588 = vmax.f32 %v550, 0.0
    %v589 = vmax.f32 %v552, 0.0
    %v590 = vmax.f32 %v449, 0.0
    %v591 = vmax.f32 %v451, 0.0
    %v592 = vmax.f32 %v556, 0.0
    %v593 = vmax.f32 %v558, 0.0
    %v594 = vmax.f32 %v455, 0.0
    %v595 = vmax.f32 %v457, 0.0
    %v596 = vmax.f32 %v562, 0.0
    %v597 = vmax.f32 %v564, 0.0
    %v598 = vmax.f32 %v461, 0.0
    %v599 = vmax.f32 %v463, 0.0
    %v600 = vmax.f32 %v568, 0.0
    %v601 = vmax.f32 %v570, 0.0
    %v602 = vmax.f32 %v467, 0.0
    %v603 = vmax.f32 %v469, 0.0
    %v604 = vmax.f32 %v574, 0.0
    %v605 = vmax.f32 %v576, 0.0
    %607 = vset.pattern.permute.xlu0 0
    %608 = vperm.xlu0 %607, %v46
    %v609 = vpop.permute.xlu0 %608
    %612 = vset.pattern.permute.xlu0 0
    %613 = vperm.xlu0 %612, %v47
    %v614 = vpop.permute.xlu0 %613
    %617 = vset.pattern.permute.xlu0 0
    %618 = vperm.xlu0 %617, %v48
    %v619 = vpop.permute.xlu0 %618
    %vm621 = vcmask 449536
    %v623 = vsel %vm621, %v43, 0
    %v626 = vsel %vm621, %v44, 0
    %v629 = vsel %vm621, %v45, 0
    %vm631 = vcmask 1046528
    %v633 = vsel %vm631, %v602, 0
    %v636 = vsel %vm631, %v603, 0
    %v639 = vsel %vm631, %v604, 0
    %v642 = vsel %vm631, %v605, 0
    %644 = vmatprep.subr.mxu0 %v579
    %645 = vmatpush1.msra.mxu0 %v578
    %646 = vmatprep.subr.mxu0 %v583
    %647 = vmatpush1.msra.mxu0 %v582
    %648 = vmatprep.subr.mxu0 %v587
    %649 = vmatpush1.msra.mxu0 %v586
    %650 = vmatprep.subr.mxu0 %v591
    %651 = vmatpush1.msra.mxu0 %v590
    %652 = vmatprep.subr.mxu0 %v595
    %653 = vmatpush1.msra.mxu0 %v594
    %654 = vmatprep.subr.mxu0 %v599
    %655 = vmatpush1.msra.mxu0 %v598
    %656 = vmatprep.subr.mxu0 %v636
    %657 = vmatpush1.msra.mxu0 %v633
    %658 = vmatprep.subr.mxu0 0.0
    %659 = vmatpush1.msra.mxu0 0.0
    %660 = vmatprep.subr.mxu0 0.0
    %661 = vmatpush1.msra.mxu0 0.0
    %662 = vmatprep.subr.mxu0 0.0
    %663 = vmatpush1.msra.mxu0 0.0
    %664 = vmatprep.subr.mxu0 0.0
    %665 = vmatpush1.msra.mxu0 0.0
    %666 = vmatprep.subr.mxu0 0.0
    %667 = vmatpush1.msra.mxu0 0.0
    %668 = vmatprep.subr.mxu0 0.0
    %669 = vmatpush1.msra.mxu0 0.0
    %670 = vmatprep.subr.mxu0 0.0
    %671 = vmatpush1.msra.mxu0 0.0
    %672 = vmatprep.subr.mxu0 0.0
    %673 = vmatpush1.msra.mxu0 0.0
    %674 = vmatprep.subr.mxu0 0.0
    %675 = vmatpush1.msra.mxu0 0.0
    %676 = vmatprep.subr.mxu0 0.0
    %677 = vmatpush1.msra.mxu0 0.0
    %678 = vmatprep.subr.mxu0 0.0
    %679 = vmatpush1.msra.mxu0 0.0
    %680 = vmatprep.subr.mxu0 0.0
    %681 = vmatpush1.msra.mxu0 0.0
    %682 = vmatprep.subr.mxu0 0.0
    %683 = vmatpush1.msra.mxu0 0.0
    %684 = vmatprep.subr.mxu0 0.0
    %685 = vmatpush1.msra.mxu0 0.0
    %686 = vmatprep.subr.mxu0 0.0
    %687 = vmatpush1.msra.mxu0 0.0
    %688 = vmatprep.subr.mxu0 0.0
    %689 = vmatpush1.msra.mxu0 0.0
    %690 = vmatprep.subr.mxu0 0.0
    %691 = vmatpush1.msra.mxu0 0.0
    %692 = vmatprep.subr.mxu0 0.0
    %693 = vmatpush1.msra.mxu0 0.0
    %694 = vmatprep.subr.mxu0 0.0
    %695 = vmatpush1.msra.mxu0 0.0
    %696 = vmatprep.subr.mxu0 0.0
    %697 = vmatpush1.msra.mxu0 0.0
    %698 = vmatprep.subr.mxu0 0.0
    %699 = vmatpush1.msra.mxu0 0.0
    %700 = vmatprep.subr.mxu0 0.0
    %701 = vmatpush1.msra.mxu0 0.0
    %702 = vmatprep.subr.mxu0 0.0
    %703 = vmatpush1.msra.mxu0 0.0
    %704 = vmatprep.subr.mxu0 0.0
    %705 = vmatpush1.msra.mxu0 0.0
    %706 = vmatprep.subr.mxu0 0.0
    %707 = vmatpush1.msra.mxu0 0.0
    %708 = vmatprep.mubr.f32.mxu0 0.0
    %709 = vmatmul.mubr.f32.gmra.mrb[0].mxu0 %v623
    %v710 = vpop.f32.mrb[0].mxu0
    %v711 = vadd.f32 %v609, %v710
    %v712 = vpop.f32.mrb[0].mxu0
    %v713 = vadd.f32 %v609, %v712
    %714 = vmatprep.mubr.f32.mxu0 0.0
    %715 = vmatmul.mubr.f32.gmra.mrb[0].mxu0 %v626
    %v716 = vpop.f32.mrb[0].mxu0
    %v717 = vadd.f32 %v614, %v716
    %v718 = vpop.f32.mrb[0].mxu0
    %v719 = vadd.f32 %v614, %v718
    %720 = vmatprep.mubr.f32.mxu0 0.0
    %721 = vmatmul.mubr.f32.gmra.mrb[0].mxu0 %v629
    %v722 = vpop.f32.mrb[0].mxu0
    %v723 = vadd.f32 %v619, %v722
    %v724 = vpop.f32.mrb[0].mxu0
    %v725 = vadd.f32 %v619, %v724
    %726 = vdwg.mxu0
    %727 = vmatprep.subr.mxu0 %v581
    %728 = vmatpush1.msra.mxu0 %v580
    %729 = vmatprep.subr.mxu0 %v585
    %730 = vmatpush1.msra.mxu0 %v584
    %731 = vmatprep.subr.mxu0 %v589
    %732 = vmatpush1.msra.mxu0 %v588
    %733 = vmatprep.subr.mxu0 %v593
    %734 = vmatpush1.msra.mxu0 %v592
    %735 = vmatprep.subr.mxu0 %v597
    %736 = vmatpush1.msra.mxu0 %v596
    %737 = vmatprep.subr.mxu0 %v601
    %738 = vmatpush1.msra.mxu0 %v600
    %739 = vmatprep.subr.mxu0 %v642
    %740 = vmatpush1.msra.mxu0 %v639
    %741 = vmatprep.subr.mxu0 0.0
    %742 = vmatpush1.msra.mxu0 0.0
    %743 = vmatprep.subr.mxu0 0.0
    %744 = vmatpush1.msra.mxu0 0.0
    %745 = vmatprep.subr.mxu0 0.0
    %746 = vmatpush1.msra.mxu0 0.0
    %747 = vmatprep.subr.mxu0 0.0
    %748 = vmatpush1.msra.mxu0 0.0
    %749 = vmatprep.subr.mxu0 0.0
    %750 = vmatpush1.msra.mxu0 0.0
    %751 = vmatprep.subr.mxu0 0.0
    %752 = vmatpush1.msra.mxu0 0.0
    %753 = vmatprep.subr.mxu0 0.0
    %754 = vmatpush1.msra.mxu0 0.0
    %755 = vmatprep.subr.mxu0 0.0
    %756 = vmatpush1.msra.mxu0 0.0
    %757 = vmatprep.subr.mxu0 0.0
    %758 = vmatpush1.msra.mxu0 0.0
    %759 = vmatprep.subr.mxu0 0.0
    %760 = vmatpush1.msra.mxu0 0.0
    %761 = vmatprep.subr.mxu0 0.0
    %762 = vmatpush1.msra.mxu0 0.0
    %763 = vmatprep.subr.mxu0 0.0
    %764 = vmatpush1.msra.mxu0 0.0
    %765 = vmatprep.subr.mxu0 0.0
    %766 = vmatpush1.msra.mxu0 0.0
    %767 = vmatprep.subr.mxu0 0.0
    %768 = vmatpush1.msra.mxu0 0.0
    %769 = vmatprep.subr.mxu0 0.0
    %770 = vmatpush1.msra.mxu0 0.0
    %771 = vmatprep.subr.mxu0 0.0
    %772 = vmatpush1.msra.mxu0 0.0
    %773 = vmatprep.subr.mxu0 0.0
    %774 = vmatpush1.msra.mxu0 0.0
    %775 = vmatprep.subr.mxu0 0.0
    %776 = vmatpush1.msra.mxu0 0.0
    %777 = vmatprep.subr.mxu0 0.0
    %778 = vmatpush1.msra.mxu0 0.0
    %779 = vmatprep.subr.mxu0 0.0
    %780 = vmatpush1.msra.mxu0 0.0
    %781 = vmatprep.subr.mxu0 0.0
    %782 = vmatpush1.msra.mxu0 0.0
    %783 = vmatprep.subr.mxu0 0.0
    %784 = vmatpush1.msra.mxu0 0.0
    %785 = vmatprep.subr.mxu0 0.0
    %786 = vmatpush1.msra.mxu0 0.0
    %787 = vmatprep.subr.mxu0 0.0
    %788 = vmatpush1.msra.mxu0 0.0
    %789 = vmatprep.subr.mxu0 0.0
    %790 = vmatpush1.msra.mxu0 0.0
    %791 = vmatprep.mubr.f32.mxu0 0.0
    %792 = vmatmul.mubr.f32.gmra.mrb[0].mxu0 %v623
    %v793 = vpop.f32.mrb[0].mxu0
    %v794 = vadd.f32 %v609, %v793
    %v795 = vpop.f32.mrb[0].mxu0
    %v796 = vadd.f32 %v609, %v795
    %797 = vmatprep.mubr.f32.mxu0 0.0
    %798 = vmatmul.mubr.f32.gmra.mrb[0].mxu0 %v626
    %v799 = vpop.f32.mrb[0].mxu0
    %v800 = vadd.f32 %v614, %v799
    %v801 = vpop.f32.mrb[0].mxu0
    %v802 = vadd.f32 %v614, %v801
    %803 = vmatprep.mubr.f32.mxu0 0.0
    %804 = vmatmul.mubr.f32.gmra.mrb[0].mxu0 %v629
    %v805 = vpop.f32.mrb[0].mxu0
    %v806 = vadd.f32 %v619, %v805
    %v807 = vpop.f32.mrb[0].mxu0
    %v808 = vadd.f32 %v619, %v807
    %809 = vdwg.mxu0
    %v810 = vmax.f32 %v711, 0.0
    %v811 = vmax.f32 %v713, 0.0
    %v812 = vmax.f32 %v794, 0.0
    %v813 = vmax.f32 %v796, 0.0
    %v814 = vmax.f32 %v717, 0.0
    %v815 = vmax.f32 %v719, 0.0
    %v816 = vmax.f32 %v800, 0.0
    %v817 = vmax.f32 %v802, 0.0
    %v818 = vmax.f32 %v723, 0.0
    %v819 = vmax.f32 %v725, 0.0
    %v820 = vmax.f32 %v806, 0.0
    %v821 = vmax.f32 %v808, 0.0
    %823 = vset.pattern.permute.xlu0 0
    %824 = vperm.xlu0 %823, %v50
    %v825 = vpop.permute.xlu0 %824
    %v827 = vlaneseq
    %v828 = vshrl.u32 %v827, 7
    %v829 = vsub.s32 0, %v828
    %v830 = vrot.slane %v825, %v829
    %vm831 = vcmask 162816
    %v833 = vsel %vm831, %v49, 0
    %vm835 = vcmask 1043456
    %v837 = vsel %vm835, %v818, 0
    %v840 = vsel %vm835, %v819, 0
    %v843 = vsel %vm835, %v820, 0
    %v846 = vsel %vm835, %v821, 0
    %848 = vmatprep.subr.mxu0 %v811
    %849 = vmatpush1.msra.mxu0 %v810
    %850 = vmatprep.subr.mxu0 %v815
    %851 = vmatpush1.msra.mxu0 %v814
    %852 = vmatprep.subr.mxu0 %v840
    %853 = vmatpush1.msra.mxu0 %v837
    %854 = vmatprep.subr.mxu0 0.0
    %855 = vmatpush1.msra.mxu0 0.0
    %856 = vmatprep.subr.mxu0 0.0
    %857 = vmatpush1.msra.mxu0 0.0
    %858 = vmatprep.subr.mxu0 0.0
    %859 = vmatpush1.msra.mxu0 0.0
    %860 = vmatprep.subr.mxu0 0.0
    %861 = vmatpush1.msra.mxu0 0.0
    %862 = vmatprep.subr.mxu0 0.0
    %863 = vmatpush1.msra.mxu0 0.0
    %864 = vmatprep.subr.mxu0 0.0
    %865 = vmatpush1.msra.mxu0 0.0
    %866 = vmatprep.subr.mxu0 0.0
    %867 = vmatpush1.msra.mxu0 0.0
    %868 = vmatprep.subr.mxu0 0.0
    %869 = vmatpush1.msra.mxu0 0.0
    %870 = vmatprep.subr.mxu0 0.0
    %871 = vmatpush1.msra.mxu0 0.0
    %872 = vmatprep.subr.mxu0 0.0
    %873 = vmatpush1.msra.mxu0 0.0
    %874 = vmatprep.subr.mxu0 0.0
    %875 = vmatpush1.msra.mxu0 0.0
    %876 = vmatprep.subr.mxu0 0.0
    %877 = vmatpush1.msra.mxu0 0.0
    %878 = vmatprep.subr.mxu0 0.0
    %879 = vmatpush1.msra.mxu0 0.0
    %880 = vmatprep.subr.mxu0 0.0
    %881 = vmatpush1.msra.mxu0 0.0
    %882 = vmatprep.subr.mxu0 0.0
    %883 = vmatpush1.msra.mxu0 0.0
    %884 = vmatprep.subr.mxu0 0.0
    %885 = vmatpush1.msra.mxu0 0.0
    %886 = vmatprep.subr.mxu0 0.0
    %887 = vmatpush1.msra.mxu0 0.0
    %888 = vmatprep.subr.mxu0 0.0
    %889 = vmatpush1.msra.mxu0 0.0
    %890 = vmatprep.subr.mxu0 0.0
    %891 = vmatpush1.msra.mxu0 0.0
    %892 = vmatprep.subr.mxu0 0.0
    %893 = vmatpush1.msra.mxu0 0.0
    %894 = vmatprep.subr.mxu0 0.0
    %895 = vmatpush1.msra.mxu0 0.0
    %896 = vmatprep.subr.mxu0 0.0
    %897 = vmatpush1.msra.mxu0 0.0
    %898 = vmatprep.subr.mxu0 0.0
    %899 = vmatpush1.msra.mxu0 0.0
    %900 = vmatprep.subr.mxu0 0.0
    %901 = vmatpush1.msra.mxu0 0.0
    %902 = vmatprep.subr.mxu0 0.0
    %903 = vmatpush1.msra.mxu0 0.0
    %904 = vmatprep.subr.mxu0 0.0
    %905 = vmatpush1.msra.mxu0 0.0
    %906 = vmatprep.subr.mxu0 0.0
    %907 = vmatpush1.msra.mxu0 0.0
    %908 = vmatprep.subr.mxu0 0.0
    %909 = vmatpush1.msra.mxu0 0.0
    %910 = vmatprep.subr.mxu0 0.0
    %911 = vmatpush1.msra.mxu0 0.0
    %912 = vmatprep.mubr.f32.mxu0 0.0
    %913 = vmatmul.mubr.f32.gmra.mrb[0].mxu0 %v833
    %v914 = vpop.f32.mrb[0].mxu0
    %v915 = vadd.f32 %v830, %v914
    %v916 = vpop.f32.mrb[0].mxu0
    %v917 = vadd.f32 %v830, %v916
    %918 = vdwg.mxu0
    %919 = vmatprep.subr.mxu0 %v813
    %920 = vmatpush1.msra.mxu0 %v812
    %921 = vmatprep.subr.mxu0 %v817
    %922 = vmatpush1.msra.mxu0 %v816
    %923 = vmatprep.subr.mxu0 %v846
    %924 = vmatpush1.msra.mxu0 %v843
    %925 = vmatprep.subr.mxu0 0.0
    %926 = vmatpush1.msra.mxu0 0.0
    %927 = vmatprep.subr.mxu0 0.0
    %928 = vmatpush1.msra.mxu0 0.0
    %929 = vmatprep.subr.mxu0 0.0
    %930 = vmatpush1.msra.mxu0 0.0
    %931 = vmatprep.subr.mxu0 0.0
    %932 = vmatpush1.msra.mxu0 0.0
    %933 = vmatprep.subr.mxu0 0.0
    %934 = vmatpush1.msra.mxu0 0.0
    %935 = vmatprep.subr.mxu0 0.0
    %936 = vmatpush1.msra.mxu0 0.0
    %937 = vmatprep.subr.mxu0 0.0
    %938 = vmatpush1.msra.mxu0 0.0
    %939 = vmatprep.subr.mxu0 0.0
    %940 = vmatpush1.msra.mxu0 0.0
    %941 = vmatprep.subr.mxu0 0.0
    %942 = vmatpush1.msra.mxu0 0.0
    %943 = vmatprep.subr.mxu0 0.0
    %944 = vmatpush1.msra.mxu0 0.0
    %945 = vmatprep.subr.mxu0 0.0
    %946 = vmatpush1.msra.mxu0 0.0
    %947 = vmatprep.subr.mxu0 0.0
    %948 = vmatpush1.msra.mxu0 0.0
    %949 = vmatprep.subr.mxu0 0.0
    %950 = vmatpush1.msra.mxu0 0.0
    %951 = vmatprep.subr.mxu0 0.0
    %952 = vmatpush1.msra.mxu0 0.0
    %953 = vmatprep.subr.mxu0 0.0
    %954 = vmatpush1.msra.mxu0 0.0
    %955 = vmatprep.subr.mxu0 0.0
    %956 = vmatpush1.msra.mxu0 0.0
    %957 = vmatprep.subr.mxu0 0.0
    %958 = vmatpush1.msra.mxu0 0.0
    %959 = vmatprep.subr.mxu0 0.0
    %960 = vmatpush1.msra.mxu0 0.0
    %961 = vmatprep.subr.mxu0 0.0
    %962 = vmatpush1.msra.mxu0 0.0
    %963 = vmatprep.subr.mxu0 0.0
    %964 = vmatpush1.msra.mxu0 0.0
    %965 = vmatprep.subr.mxu0 0.0
    %966 = vmatpush1.msra.mxu0 0.0
    %967 = vmatprep.subr.mxu0 0.0
    %968 = vmatpush1.msra.mxu0 0.0
    %969 = vmatprep.subr.mxu0 0.0
    %970 = vmatpush1.msra.mxu0 0.0
    %971 = vmatprep.subr.mxu0 0.0
    %972 = vmatpush1.msra.mxu0 0.0
    %973 = vmatprep.subr.mxu0 0.0
    %974 = vmatpush1.msra.mxu0 0.0
    %975 = vmatprep.subr.mxu0 0.0
    %976 = vmatpush1.msra.mxu0 0.0
    %977 = vmatprep.subr.mxu0 0.0
    %978 = vmatpush1.msra.mxu0 0.0
    %979 = vmatprep.subr.mxu0 0.0
    %980 = vmatpush1.msra.mxu0 0.0
    %981 = vmatprep.subr.mxu0 0.0
    %982 = vmatpush1.msra.mxu0 0.0
    %983 = vmatprep.mubr.f32.mxu0 0.0
    %984 = vmatmul.mubr.f32.gmra.mrb[0].mxu0 %v833
    %v985 = vpop.f32.mrb[0].mxu0
    %v986 = vadd.f32 %v830, %v985
    %v987 = vpop.f32.mrb[0].mxu0
    %v988 = vadd.f32 %v830, %v987
    %989 = vdwg.mxu0
    %v990 = vand.u32 2147483647, %v915
    %v991 = vand.u32 2147483647, %v917
    %v992 = vand.u32 2147483647, %v986
    %v993 = vand.u32 2147483647, %v988
    %v994 = vsub.f32 0.0, %v990
    %v995 = vsub.f32 0.0, %v991
    %v996 = vsub.f32 0.0, %v992
    %v997 = vsub.f32 0.0, %v993
    %v998 = vmul.f32 %v994, 1.442695
    %v999 = vpow.pop %v998
    %v1000 = vmul.f32 %v995, 1.442695
    %v1001 = vpow.pop %v1000
    %v1002 = vmul.f32 %v996, 1.442695
    %v1003 = vpow.pop %v1002
    %v1004 = vmul.f32 %v997, 1.442695
    %v1005 = vpow.pop %v1004
    %v1006 = vadd.f32 %v999, 1.0
    %v1007 = vadd.f32 %v1001, 1.0
    %v1008 = vadd.f32 %v1003, 1.0
    %v1009 = vadd.f32 %v1005, 1.0
    %v1010 = vrcp.pop %v1006
    %v1011 = vrcp.pop %v1007
    %v1012 = vrcp.pop %v1008
    %v1013 = vrcp.pop %v1009
    %vm1014 = vcmp.ge.f32.partialorder %v915, 0.0
    %vm1015 = vcmp.ge.f32.partialorder %v917, 0.0
    %vm1016 = vcmp.ge.f32.partialorder %v986, 0.0
    %vm1017 = vcmp.ge.f32.partialorder %v988, 0.0
    %v1018 = vmul.f32 %v999, %v1010
    %v1019 = vmul.f32 %v1001, %v1011
    %v1020 = vmul.f32 %v1003, %v1012
    %v1021 = vmul.f32 %v1005, %v1013
    %v1022 = vsel %vm1014, %v1010, %v1018
    %v1023 = vsel %vm1015, %v1011, %v1019
    %v1024 = vsel %vm1016, %v1012, %v1020
    %v1025 = vsel %vm1017, %v1013, %v1021
    %v1030 = vcombine.low %v1022, %v1023
    %v1031 = vcombine.low %v1024, %v1025
    %v1033 = vunpack.c.l.s4 1966171168
    %v1034 = vunpack.c.0.s8 %v1033
    %v1035 = vlaneseq
    %v1036 = vshrl.u32 %v1035, 7
    %v1037 = vsub.s32 %v1034, %v1036
    %v1038 = vrot.slane %v1030, %v1037
    %v1040 = vunpack.c.l.s4 1966171168
    %v1041 = vunpack.c.0.s8 %v1040
    %v1042 = vlaneseq
    %v1043 = vshrl.u32 %v1042, 7
    %v1044 = vsub.s32 %v1041, %v1043
    %v1045 = vrot.slane %v1031, %v1044
    %v1046 = vcombine.low %v1038, %v1045
    %v1048 = vunpack.c.l.s4 1966171168
    %v1049 = vunpack.c.0.s8 %v1048
    %v1050 = vlaneseq
    %v1051 = vshrl.u32 %v1050, 7
    %v1052 = vsub.s32 %v1049, %v1051
    %v1053 = vrot.slane %v1046, %v1052
    %v1055 = vlaneseq
    %vm1056 = vcmp.ge.s32.totalorder %v1055, 0
    %vm1057 = vcmp.lt.s32.totalorder %v1055, 512
    %vm1058 = vmand %vm1056, %vm1057
    %1059 = vst.msk [vmem:[#allocation3] sm:$0xf] %vm1058, %v1053
    // Predicated region
    $region30: #{tpu_custom_call.1} parent=1 // pred_check
      _
    $region31: #{tpu_custom_call.1} parent=1 // pred_check_branch
      %1061 = sbr.rel (0) target = $region33
    $region32: #{tpu_custom_call.1} parent=1 // pred_region
      %s1063 = ssub.s32 64, 64
      %1064 = vsyncadd [#allocation4], %s1063
      %s1066 = sshll.u32 [#allocation3], 4
      %s1067 = int_to_ptr.vmem [resolvable:$true] %s1066
      %1069 = dma.vmem_to_hbm [thread:$0]  %s1067, 64, %s7, [#allocation4]
    $region33: #{tpu_custom_call.1} parent=1 // pred_fallthru
      _
    // Predicated region
    $region34: #{tpu_custom_call.1} parent=1 // pred_check
      _
    $region35: #{tpu_custom_call.1} parent=1 // pred_check_branch
      %1071 = sbr.rel (0) target = $region37
    $region36: #{tpu_custom_call.1} parent=1 // pred_region
      %1072 = dma.done [#allocation4], 64
    $region37: #{tpu_custom_call.1} parent=1 // pred_fallthru
      _
    %1073 = vsyncpa [#allocation4], 1

</llo_original>
